<compile_context>
chip_gen: v7x
topology: tpu7x:2x2x1
jax: 0.10.0
libtpu: 0.0.40
codegen_flags: <defaults>
</compile_context>

<pallas_src>
import functools
import math

import jax
import jax.numpy as jnp
from jax.experimental import pallas as pl
from jax.experimental.pallas import tpu as pltpu


def _pe_kernel(x_ref, pe_ref, o_ref, *, scale):
    # x_ref: (TS, B, D), pe_ref: (TS, 1, D) -> sublane-broadcast add over batch.
    o_ref[...] = x_ref[...] * scale + pe_ref[...]


def make_positional_encoding_table(d_model, max_len=42, dtype=jnp.float32):
    """Sinusoidal table identical to the PyTorch __init__; shape (max_len, 1, d_model)."""
    position = jnp.arange(0, max_len, dtype=jnp.float32)[:, None]            # (max_len, 1)
    div_term = jnp.exp(
        jnp.arange(0, d_model, 2, dtype=jnp.float32) * (-math.log(10000.0) / d_model)
    )                                                                        # (ceil(d/2),)
    pe = jnp.zeros((max_len, d_model), dtype=jnp.float32)
    pe = pe.at[:, 0::2].set(jnp.sin(position * div_term))
    # Odd columns number floor(d/2); slice div_term so odd d_model does not break.
    pe = pe.at[:, 1::2].set(jnp.cos(position * div_term[: d_model // 2]))
    # unsqueeze(0).transpose(0,1) -> (max_len, 1, d_model)
    return pe[:, None, :].astype(dtype)


def _choose_tile_rows(seq_len, row_bytes, target_bytes):
    """Pick a sequence tile so each x tile is ~target_bytes (1-4 MiB sweet spot)."""
    if seq_len * row_bytes <= target_bytes:
        return seq_len
    ts = max(1, target_bytes // row_bytes)
    if ts >= 8:
        ts = (ts // 8) * 8  # tidy multiple-of-8 leading tiles
    return min(ts, seq_len)


def positional_encoding(
    x,
    pe_table,
    d_model,
    *,
    tile_rows=None,
    tile_target_bytes=2 * 1024 * 1024,   # ~2 MiB x-tile: near HBM roofline, fits v7x VMEM
    donate_x=False,                      # alias x -> out if caller no longer needs x
    vmem_limit_bytes=32 * 1024 * 1024,   # explicit budget, portable across v5e/v6e/v7x
):
    """x: (S, B, D); pe_table: (max_len, 1, D). Returns x * sqrt(d_model) + pe[:S]."""
    S, B, D = x.shape
    max_len = pe_table.shape[0]
    if S > max_len:
        raise ValueError(f"seq_len={S} exceeds positional-encoding max_len={max_len}")
    if pe_table.shape != (max_len, 1, D):
        raise ValueError(f"pe_table shape {pe_table.shape} != ({max_len}, 1, {D})")

    itemsize = jnp.dtype(x.dtype).itemsize
    row_bytes = B * D * itemsize
    ts = int(tile_rows) if tile_rows is not None else _choose_tile_rows(
        S, row_bytes, tile_target_bytes
    )
    ts = max(1, min(ts, S))
    grid = (pl.cdiv(S, ts),)

    kernel = functools.partial(_pe_kernel, scale=float(math.sqrt(d_model)))

    cost = pl.CostEstimate(
        flops=2 * S * B * D,  # mul + add per element
        transcendentals=0,
        bytes_accessed=2 * S * B * D * itemsize
        + S * D * jnp.dtype(pe_table.dtype).itemsize,
    )

    return pl.pallas_call(
        kernel,
        out_shape=jax.ShapeDtypeStruct((S, B, D), x.dtype),
        grid=grid,
        in_specs=[
            # x tile, streamed over the sequence axis (auto double-buffered).
            pl.BlockSpec((ts, B, D), lambda i: (i, 0, 0)),
            # pe tile read straight from the full (max_len, 1, D) table; the
            # index_map only ever touches the first ceil(S/ts) blocks.
            pl.BlockSpec((ts, 1, D), lambda i: (i, 0, 0)),
        ],
        out_specs=pl.BlockSpec((ts, B, D), lambda i: (i, 0, 0)),
        compiler_params=pltpu.CompilerParams(
            dimension_semantics=("parallel",),   # independent steps -> both TCs on v7x
            vmem_limit_bytes=vmem_limit_bytes,
        ),
        cost_estimate=cost,
        input_output_aliases={0: 0} if donate_x else {},
    )(x, pe_table)


if __name__ == "__main__":
    max_len = 42

    # Small demo shapes consistent with the module.
    seq_len, batch, d_model = 8, 2, 32
    key = jax.random.PRNGKey(0)
    x = jax.random.normal(key, (seq_len, batch, d_model), dtype=jnp.float32)
    pe_table = make_positional_encoding_table(d_model, max_len=max_len)

    out = jax.block_until_ready(positional_encoding(x, pe_table, d_model))
    ref = x * math.sqrt(d_model) + pe_table[:seq_len]
    assert out.shape == (seq_len, batch, d_model)
    assert jnp.allclose(out, ref, atol=1e-5, rtol=1e-5)

    # Second check: force a real multi-step pipelined grid (incl. a partial
    # last block) at a lane-dense d_model.
    seq2, batch2, dm2 = 36, 4, 128
    x2 = jax.random.normal(jax.random.PRNGKey(1), (seq2, batch2, dm2), dtype=jnp.float32)
    pe2 = make_positional_encoding_table(dm2, max_len=max_len)
    out2 = jax.block_until_ready(positional_encoding(x2, pe2, dm2, tile_rows=8))
    ref2 = x2 * math.sqrt(dm2) + pe2[:seq2]
    assert out2.shape == (seq2, batch2, dm2)
    assert jnp.allclose(out2, ref2, atol=1e-5, rtol=1e-5)

    print("KERNEL_OK")
</pallas_src>

<mosaic_0001>
module attributes {stable_mosaic.version = 11 : i64} {
  func.func @_pe_kernel(%arg0: i32, %arg1: memref<8x2x32xf32, #tpu.memory_space<vmem>>, %arg2: memref<8x1x32xf32, #tpu.memory_space<vmem>>, %arg3: memref<8x2x32xf32, #tpu.memory_space<vmem>>) attributes {dimension_semantics = [#tpu.dimension_semantics<parallel>], iteration_bounds = array<i64: 1>, scalar_prefetch = 0 : i64, scratch_operands = 0 : i64, tpu.core_type = #tpu.core_type<tc>, window_params = [{transform_indices = @transform_0, window_bounds = array<i64: 8, 2, 32>}, {transform_indices = @transform_1, window_bounds = array<i64: 8, 1, 32>}, {transform_indices = @transform_2, window_bounds = array<i64: 8, 2, 32>}]} {
    %c0 = arith.constant 0 : index
    %c0_0 = arith.constant 0 : index
    %c0_1 = arith.constant 0 : index
    %0 = vector.load %arg1[%c0, %c0_0, %c0_1] : memref<8x2x32xf32, #tpu.memory_space<vmem>>, vector<8x2x32xf32>
    %cst = arith.constant 5.65685415 : f32
    %1 = vector.broadcast %cst : f32 to vector<8x2x32xf32>
    %2 = arith.mulf %0, %1 : vector<8x2x32xf32>
    %c0_2 = arith.constant 0 : index
    %c0_3 = arith.constant 0 : index
    %c0_4 = arith.constant 0 : index
    %3 = vector.load %arg2[%c0_2, %c0_3, %c0_4] : memref<8x1x32xf32, #tpu.memory_space<vmem>>, vector<8x1x32xf32>
    %4 = vector.broadcast %3 : vector<8x1x32xf32> to vector<8x2x32xf32>
    %5 = arith.addf %2, %4 : vector<8x2x32xf32>
    %c0_5 = arith.constant 0 : index
    %c0_6 = arith.constant 0 : index
    %c0_7 = arith.constant 0 : index
    %6 = vector.load %arg3[%c0_5, %c0_6, %c0_7] : memref<8x2x32xf32, #tpu.memory_space<vmem>>, vector<8x2x32xf32>
    tpu.vector_store %arg3[%c0_5, %c0_6, %c0_7], %5 {strides = array<i32>} : memref<8x2x32xf32, #tpu.memory_space<vmem>>, vector<8x2x32xf32>,
    return
  }
  func.func @transform_0(%arg0: i32) -> (i32, i32, i32) {
    %c0_i32 = arith.constant 0 : i32
    %c0_i32_0 = arith.constant 0 : i32
    %c0_i32_1 = arith.constant 0 : i32
    return %arg0, %c0_i32, %c0_i32_0 : i32, i32, i32
  }
  func.func @transform_1(%arg0: i32) -> (i32, i32, i32) {
    %c0_i32 = arith.constant 0 : i32
    %c0_i32_0 = arith.constant 0 : i32
    %c0_i32_1 = arith.constant 0 : i32
    return %arg0, %c0_i32, %c0_i32_0 : i32, i32, i32
  }
  func.func @transform_2(%arg0: i32) -> (i32, i32, i32) {
    %c0_i32 = arith.constant 0 : i32
    %c0_i32_0 = arith.constant 0 : i32
    %c0_i32_1 = arith.constant 0 : i32
    return %arg0, %c0_i32, %c0_i32_0 : i32, i32, i32
  }
}

</mosaic_0001>

<llo_original>
// kernel: tpu_custom_call.1
$region0: #{tpu_custom_call.1}
  #allocation0 [shape = 'u32[]', space=smem, size = 0x4, offset = 0x4, fixed_abs, tag = 'smem constant byte address 0x4 - core index']
  #allocation1 [shape = 'u32[144,128]{1,0:T(1,128)}', space=vmem, size = 0x12000, scoped, tag = 'internal scratch']
  %s0 = inlined_call_operand.vmem [shape: f32[8,2,32], index: 0, kind: input, shape index: {}]
  %s1 = inlined_call_operand.vmem [shape: f32[42,1,32], index: 1, kind: input, shape index: {}]
  %s2 = inlined_call_operand.hbm [shape: f32[8,2,32], index: 2, kind: output, shape index: {}]
  %s3 = sld [smem:[#allocation0]]
  $region18: #{tpu_custom_call.1} parent=0
    _
  %s5 = ssub.s32 1, %s3
  %s6 = scalar_select 0, %s5, %s3
  $region1: #{tpu_custom_call.1} parent=0
    #allocation2 [shape = 'u8[8192]{0}', space=vmem, size = 0x2000, scoped, tag = 'output window, operand 0, single buffered']
    #allocation3 [shape = 's32[1]{0}', space=sflag, size = 0x4, scoped, tag = 'scoped memory for tpu_custom_call.1']
    %7 = vsyncpa [#allocation3], 0
    // Predicated region
    $region2: #{tpu_custom_call.1} parent=1 // pred_check
      _
    $region3: #{tpu_custom_call.1} parent=1 // pred_check_branch
      %9 = sbr.rel (0) target = $region5
    $region4: #{tpu_custom_call.1} parent=1 // pred_region
      _
    $region5: #{tpu_custom_call.1} parent=1 // pred_fallthru
      _
    // Predicated region
    $region6: #{tpu_custom_call.1} parent=1 // pred_check
      _
    $region7: #{tpu_custom_call.1} parent=1 // pred_check_branch
      %11 = sbr.rel (0) target = $region9
    $region8: #{tpu_custom_call.1} parent=1 // pred_region
      _
    $region9: #{tpu_custom_call.1} parent=1 // pred_fallthru
      _
    %v12 = vld [vmem:[%s0] sm:$0x3]
    %v13 = vld [vmem:[%s0 + $0x2] sm:$0x3]
    %v14 = vld [vmem:[%s0 + $0x4] sm:$0x3]
    %v15 = vld [vmem:[%s0 + $0x6] sm:$0x3]
    %v16 = vld [vmem:[%s0 + $0x8] sm:$0x3]
    %v17 = vld [vmem:[%s0 + $0xa] sm:$0x3]
    %v18 = vld [vmem:[%s0 + $0xc] sm:$0x3]
    %v19 = vld [vmem:[%s0 + $0xe] sm:$0x3]
    %v20 = vmul.f32 %v12, 5.656854
    %v21 = vmul.f32 %v13, 5.656854
    %v22 = vmul.f32 %v14, 5.656854
    %v23 = vmul.f32 %v15, 5.656854
    %v24 = vmul.f32 %v16, 5.656854
    %v25 = vmul.f32 %v17, 5.656854
    %v26 = vmul.f32 %v18, 5.656854
    %v27 = vmul.f32 %v19, 5.656854
    %v28 = vld [vmem:[%s1] sm:$0x1]
    %v29 = vld [vmem:[%s1 + $0x1] sm:$0x1]
    %v30 = vld [vmem:[%s1 + $0x2] sm:$0x1]
    %v31 = vld [vmem:[%s1 + $0x3] sm:$0x1]
    %v32 = vld [vmem:[%s1 + $0x4] sm:$0x1]
    %v33 = vld [vmem:[%s1 + $0x5] sm:$0x1]
    %v34 = vld [vmem:[%s1 + $0x6] sm:$0x1]
    %v35 = vld [vmem:[%s1 + $0x7] sm:$0x1]
    %v44 = vlaneseq
    %v45 = vshrl.u32 %v44, 7
    %v46 = vsub.s32 0, %v45
    %v47 = vrot.slane %v28, %v46
    %v48 = vlaneseq
    %v49 = vshrl.u32 %v48, 7
    %v50 = vsub.s32 0, %v49
    %v51 = vrot.slane %v29, %v50
    %v52 = vlaneseq
    %v53 = vshrl.u32 %v52, 7
    %v54 = vsub.s32 0, %v53
    %v55 = vrot.slane %v30, %v54
    %v56 = vlaneseq
    %v57 = vshrl.u32 %v56, 7
    %v58 = vsub.s32 0, %v57
    %v59 = vrot.slane %v31, %v58
    %v60 = vlaneseq
    %v61 = vshrl.u32 %v60, 7
    %v62 = vsub.s32 0, %v61
    %v63 = vrot.slane %v32, %v62
    %v64 = vlaneseq
    %v65 = vshrl.u32 %v64, 7
    %v66 = vsub.s32 0, %v65
    %v67 = vrot.slane %v33, %v66
    %v68 = vlaneseq
    %v69 = vshrl.u32 %v68, 7
    %v70 = vsub.s32 0, %v69
    %v71 = vrot.slane %v34, %v70
    %v72 = vlaneseq
    %v73 = vshrl.u32 %v72, 7
    %v74 = vsub.s32 0, %v73
    %v75 = vrot.slane %v35, %v74
    %v84 = vadd.f32 %v20, %v47
    %v85 = vadd.f32 %v21, %v51
    %v86 = vadd.f32 %v22, %v55
    %v87 = vadd.f32 %v23, %v59
    %v88 = vadd.f32 %v24, %v63
    %v89 = vadd.f32 %v25, %v67
    %v90 = vadd.f32 %v26, %v71
    %v91 = vadd.f32 %v27, %v75
    %vm92 = vcmask 254976
    %93 = vst.msk [vmem:[#allocation2] sm:$0x3] %vm92, %v84
    %94 = vst.msk [vmem:[#allocation2 + $0x2] sm:$0x3] %vm92, %v85
    %95 = vst.msk [vmem:[#allocation2 + $0x4] sm:$0x3] %vm92, %v86
    %96 = vst.msk [vmem:[#allocation2 + $0x6] sm:$0x3] %vm92, %v87
    %97 = vst.msk [vmem:[#allocation2 + $0x8] sm:$0x3] %vm92, %v88
    %98 = vst.msk [vmem:[#allocation2 + $0xa] sm:$0x3] %vm92, %v89
    %99 = vst.msk [vmem:[#allocation2 + $0xc] sm:$0x3] %vm92, %v90
    %100 = vst.msk [vmem:[#allocation2 + $0xe] sm:$0x3] %vm92, %v91
    // Predicated region
    $region10: #{tpu_custom_call.1} parent=1 // pred_check
      _
    $region11: #{tpu_custom_call.1} parent=1 // pred_check_branch
      %102 = sbr.rel (0) target = $region13
    $region12: #{tpu_custom_call.1} parent=1 // pred_region
      %s104 = ssub.s32 256, 256
      %105 = vsyncadd [#allocation3], %s104
      %s106 = sshll.u32 [#allocation2], 4
      %s107 = int_to_ptr.vmem [resolvable:$true] %s106
      %112 = dma.vmem_to_hbm [thread:$0]  %s107, 256, %s2, [#allocation3], 32, 32, 2
    $region13: #{tpu_custom_call.1} parent=1 // pred_fallthru
      _
    // Predicated region
    $region14: #{tpu_custom_call.1} parent=1 // pred_check
      _
    $region15: #{tpu_custom_call.1} parent=1 // pred_check_branch
      %114 = sbr.rel (0) target = $region17
    $region16: #{tpu_custom_call.1} parent=1 // pred_region
      %115 = dma.done [#allocation3], 256
    $region17: #{tpu_custom_call.1} parent=1 // pred_fallthru
      _
    %116 = vsyncpa [#allocation3], 1

</llo_original>
